<compile_context>
chip_gen: v6e
topology: v6e:2x2x1
jax: 0.10.0
libtpu: 0.0.40
codegen_flags: <defaults>
</compile_context>

<pallas_src>
import jax
import jax.numpy as jnp
from jax.experimental import pallas as pl
from jax.experimental.pallas import tpu as pltpu


_VPU_LAYER1_MAX_K = 8   # below this contraction size, skip the MXU for layer 1


# --------------------------------------------------------------------------- #
# Kernel
# --------------------------------------------------------------------------- #
def _encoder_kernel(x_ref, y_ref, w1x_ref, w1y_ref, b1_ref, w2_ref, b2_ref,
                    w3_ref, b3_ref, out_ref):
    x = x_ref[...]                        # (tile, x_dim) f32
    y = y_ref[...]                        # (tile, y_dim) f32
    x_dim = x.shape[1]
    y_dim = y.shape[1]

    # ---- Layer 1: Linear(x_dim + y_dim -> H) + ReLU -------------------------
    if x_dim + y_dim <= _VPU_LAYER1_MAX_K:
        # Tiny K: broadcast-multiply-add on the VPU (f32 weights); avoids a
        # ~97%-padded MXU pass and needs no lane concat of x and y.
        w1x = w1x_ref[...]                # (x_dim, Hp) f32
        w1y = w1y_ref[...]                # (y_dim, Hp) f32
        h = b1_ref[...] + x[:, 0:1] * w1x[0:1, :]
        for k in range(1, x_dim):
            h = h + x[:, k:k + 1] * w1x[k:k + 1, :]
        for k in range(y_dim):
            h = h + y[:, k:k + 1] * w1y[k:k + 1, :]
    else:
        # Larger K: two MXU dots (bf16 operands pre-cast in the wrapper,
        # f32 accumulation) on the split weight — still no lane concat.
        h = (jnp.dot(x.astype(jnp.bfloat16), w1x_ref[...],
                     preferred_element_type=jnp.float32)
             + jnp.dot(y.astype(jnp.bfloat16), w1y_ref[...],
                       preferred_element_type=jnp.float32)
             + b1_ref[...])
    h = jnp.maximum(h, 0.0)

    # ---- Layer 2: Linear(H -> H) + ReLU   (bf16 MXU operands, f32 acc) ------
    h = jnp.dot(h.astype(jnp.bfloat16), w2_ref[...],
                preferred_element_type=jnp.float32) + b2_ref[...]
    h = jnp.maximum(h, 0.0)

    # ---- Layer 3: Linear(H -> R) --------------------------------------------
    out = jnp.dot(h.astype(jnp.bfloat16), w3_ref[...],
                  preferred_element_type=jnp.float32) + b3_ref[...]
    out_ref[...] = out.astype(out_ref.dtype)


# --------------------------------------------------------------------------- #
# Wrapper helpers
# --------------------------------------------------------------------------- #
def _round_up(a, m):
    return ((a + m - 1) // m) * m


def _num_tensorcores():
    """TensorCores per chip: 2 on v7x, 1 on v5e / v6e (best-effort detection)."""
    try:
        kind = jax.devices()[0].device_kind.lower()
    except Exception:
        return 1
    return 2 if "v7" in kind else 1


def _choose_row_tile(n, *, target=2048, min_tile=8, num_cores=1):
    """Row tile: maximal single block on 1-TC chips, >=2 steps/core on v7x."""
    if num_cores <= 1:
        # Single TensorCore: a grid split is a pure serial loop -> use one
        # full-extent block whenever N fits under the target tile.
        return min(n, target)
    # v7x: shard the row grid across both TCs and keep >= 2 steps per core so
    # each core's pipeline still overlaps input/output DMA with compute.
    desired_steps = 2 * num_cores
    tile = _round_up(max(1, -(-n // desired_steps)), min_tile)
    return max(min_tile, min(target, tile))


def _vmem_estimate(row_tile, x_dim, y_dim, h_pad, r_dim):
    """Conservative per-call VMEM footprint estimate (bytes)."""
    stream = 2 * 2 * row_tile * (x_dim + y_dim + r_dim) * 4      # dbl-buffered in/out
    weights = 2 * (((x_dim + y_dim) * h_pad + h_pad * h_pad + h_pad * r_dim) * 4
                   + (2 * h_pad + r_dim) * 4)                    # dbl-buffered residents
    temps = 3 * row_tile * h_pad * 4                             # live f32 h copies
    return stream + weights + temps


def _prepare_params(params, x_dim, use_vpu_l1):
    """Pad hidden dim to a multiple of 128 lanes, split w1, pre-cast dtypes."""
    w1 = params["w1"]
    b1 = params["b1"].reshape(1, -1)
    w2 = params["w2"]
    b2 = params["b2"].reshape(1, -1)
    w3 = params["w3"]
    b3 = params["b3"].reshape(1, -1)

    hidden = w1.shape[1]
    r_dim = w3.shape[1]
    h_pad = _round_up(hidden, 128)
    if h_pad != hidden:
        pad = h_pad - hidden
        # Zero padding is exact: padded h columns are ReLU(0)=0 and feed zero
        # rows of the next weight, so the final (N, r_dim) output is unchanged.
        w1 = jnp.pad(w1, ((0, 0), (0, pad)))
        b1 = jnp.pad(b1, ((0, 0), (0, pad)))
        w2 = jnp.pad(w2, ((0, pad), (0, pad)))
        b2 = jnp.pad(b2, ((0, 0), (0, pad)))
        w3 = jnp.pad(w3, ((0, pad), (0, 0)))

    l1_dtype = jnp.float32 if use_vpu_l1 else jnp.bfloat16   # pre-cast once here
    w1x = w1[:x_dim].astype(l1_dtype)
    w1y = w1[x_dim:].astype(l1_dtype)
    return (w1x, w1y, b1.astype(jnp.float32),
            w2.astype(jnp.bfloat16), b2.astype(jnp.float32),
            w3.astype(jnp.bfloat16), b3.astype(jnp.float32),
            h_pad, r_dim)


# --------------------------------------------------------------------------- #
# Wrapper
# --------------------------------------------------------------------------- #
def context_encoder_pallas(x, y, params, *, row_tile=None):
    """Pallas forward pass of the NDP context-encoder MLP.

    x : (N, x_dim) float, N = batch_size * num_points
    y : (N, y_dim) float
    params : dict with w1 (xy_dim,H), b1 (1,H), w2 (H,H), b2 (1,H),
             w3 (H,R), b3 (1,R)   (weights stored as [in, out])
    """
    n, x_dim = x.shape
    n_y, y_dim = y.shape
    assert n == n_y, "x and y must have the same number of rows"
    xy_dim = x_dim + y_dim
    assert params["w1"].shape[0] == xy_dim

    use_vpu_l1 = xy_dim <= _VPU_LAYER1_MAX_K
    (w1x, w1y, b1, w2, b2, w3, b3, h_pad, r_dim) = _prepare_params(
        params, x_dim, use_vpu_l1)

    x = x.astype(jnp.float32)
    y = y.astype(jnp.float32)

    # ---- Row tiling ----------------------------------------------------------
    if row_tile is None:
        row_tile = _choose_row_tile(n, num_cores=_num_tensorcores())
    row_tile = int(row_tile)
    if row_tile >= n:
        row_tile = n                       # single full-extent block, no padding
    else:
        row_tile = _round_up(row_tile, 8)  # sublane alignment for multi-step grid
        if row_tile >= n:
            row_tile = n
    n_pad = _round_up(n, row_tile)
    if n_pad != n:
        x = jnp.pad(x, ((0, n_pad - n), (0, 0)))
        y = jnp.pad(y, ((0, n_pad - n), (0, 0)))

    grid = (n_pad // row_tile,)
    row_spec = lambda feat: pl.BlockSpec((row_tile, feat), lambda i: (i, 0))
    rep_spec = lambda arr: pl.BlockSpec(arr.shape, lambda i: (0, 0))

    # Only raise the scoped-VMEM limit when a scaled-up config actually needs
    # it (large row_tile / hidden); default limits are fine for small shapes.
    cp_kwargs = {"dimension_semantics": ("parallel",)}
    vmem_needed = _vmem_estimate(row_tile, x_dim, y_dim, h_pad, r_dim)
    if vmem_needed > (12 << 20):
        cp_kwargs["vmem_limit_bytes"] = int(
            min(max(vmem_needed * 3 // 2, 32 << 20), 60 << 20))

    # TODO(synk): emit bf16 output instead of f32 if the downstream consumer
    # tolerates it — halves the dominant HBM write stream.
    out = pl.pallas_call(
        _encoder_kernel,
        out_shape=jax.ShapeDtypeStruct((n_pad, r_dim), jnp.float32),
        grid_spec=pltpu.PrefetchScalarGridSpec(
            num_scalar_prefetch=0,
            grid=grid,
            in_specs=[
                row_spec(x_dim),      # x tile   (rows, x_dim)  f32
                row_spec(y_dim),      # y tile   (rows, y_dim)  f32
                rep_spec(w1x),        # w1[:x_dim]  (x_dim, Hp)
                rep_spec(w1y),        # w1[x_dim:]  (y_dim, Hp)
                rep_spec(b1),         # b1  (1, Hp) f32
                rep_spec(w2),         # w2  (Hp, Hp) bf16
                rep_spec(b2),         # b2  (1, Hp) f32
                rep_spec(w3),         # w3  (Hp, R) bf16
                rep_spec(b3),         # b3  (1, R)  f32
            ],
            out_specs=row_spec(r_dim),
        ),
        compiler_params=pltpu.CompilerParams(**cp_kwargs),
    )(x, y, w1x, w1y, b1, w2, b2, w3, b3)

    return out[:n] if n_pad != n else out


def single_context_ndp_encoder(x, y, _, params, *, row_tile=None):
    """Mirrors SingleContextNDPEncoder.forward(x, y, _): returns (out, out)."""
    output = context_encoder_pallas(x, y, params, row_tile=row_tile)
    return output, output


# --------------------------------------------------------------------------- #
# Params + reference
# --------------------------------------------------------------------------- #
def init_params(key, x_dim, y_dim, hidden, r_dim):
    """Deterministic synthetic parameter init (Glorot-ish uniform)."""
    ks = jax.random.split(key, 6)

    def lin(k, fan_in, fan_out):
        bound = 1.0 / jnp.sqrt(fan_in)
        return jax.random.uniform(k, (fan_in, fan_out), jnp.float32,
                                  minval=-bound, maxval=bound)

    xy_dim = x_dim + y_dim
    return {
        "w1": lin(ks[0], xy_dim, hidden),
        "b1": jax.random.uniform(ks[1], (1, hidden), jnp.float32, -0.1, 0.1),
        "w2": lin(ks[2], hidden, hidden),
        "b2": jax.random.uniform(ks[3], (1, hidden), jnp.float32, -0.1, 0.1),
        "w3": lin(ks[4], hidden, r_dim),
        "b3": jax.random.uniform(ks[5], (1, r_dim), jnp.float32, -0.1, 0.1),
    }


def reference_forward(x, y, params):
    """Plain-JAX reference mirroring the kernel's precision choices."""
    bf = lambda a: a.astype(jnp.bfloat16).astype(jnp.float32)
    xy = jnp.concatenate([x, y], axis=-1)
    if xy.shape[-1] <= _VPU_LAYER1_MAX_K:
        h = xy @ params["w1"] + params["b1"]                       # f32 VPU path
    else:
        h = bf(xy) @ bf(params["w1"]) + params["b1"]               # bf16 MXU fallback
    h = jnp.maximum(h, 0.0)
    h = jnp.maximum(bf(h) @ bf(params["w2"]) + params["b2"], 0.0)  # bf16 MXU
    return bf(h) @ bf(params["w3"]) + params["b3"]                 # bf16 MXU


# --------------------------------------------------------------------------- #
# Demo / self-check
# --------------------------------------------------------------------------- #
if __name__ == "__main__":
    key = jax.random.PRNGKey(0)
    k_x, k_y, k_p = jax.random.split(key, 3)

    batch_size, num_points = 2, 9          # N = 18
    x_dim, y_dim = 1, 2                    # typical ODE-process time / obs dims
    hidden, r_dim = 32, 32
    n = batch_size * num_points

    x = jax.random.normal(k_x, (n, x_dim), jnp.float32)
    y = jax.random.normal(k_y, (n, y_dim), jnp.float32)
    params = init_params(k_p, x_dim, y_dim, hidden, r_dim)
    ref = reference_forward(x, y, params)

    # Default path: on 1-TC chips this is a single full-extent block
    # (no padding, no post-kernel slice); on v7x it shards across both TCs.
    out_a, out_b = single_context_ndp_encoder(x, y, None, params)
    out_a = jax.block_until_ready(out_a)
    assert out_a.shape == (n, r_dim)
    assert out_b.shape == (n, r_dim)
    assert jnp.allclose(out_a, out_b)
    assert jnp.allclose(out_a, ref, atol=1e-2, rtol=1e-2), "mismatch vs reference"

    # Forced small tile: exercises the multi-step grid + row-padding path.
    out_tiled, _ = single_context_ndp_encoder(x, y, None, params, row_tile=8)
    out_tiled = jax.block_until_ready(out_tiled)
    assert jnp.allclose(out_tiled, ref, atol=1e-2, rtol=1e-2), "tiled mismatch"

    print("KERNEL_OK")
</pallas_src>

<mosaic_0001>
module attributes {stable_mosaic.version = 11 : i64} {
  func.func @_encoder_kernel(%arg0: i32, %arg1: memref<18x1xf32, #tpu.memory_space<vmem>>, %arg2: memref<18x2xf32, #tpu.memory_space<vmem>>, %arg3: memref<1x128xf32, #tpu.memory_space<vmem>>, %arg4: memref<2x128xf32, #tpu.memory_space<vmem>>, %arg5: memref<1x128xf32, #tpu.memory_space<vmem>>, %arg6: memref<128x128xbf16, #tpu.memory_space<vmem>>, %arg7: memref<1x128xf32, #tpu.memory_space<vmem>>, %arg8: memref<128x32xbf16, #tpu.memory_space<vmem>>, %arg9: memref<1x32xf32, #tpu.memory_space<vmem>>, %arg10: memref<18x32xf32, #tpu.memory_space<vmem>>) attributes {dimension_semantics = [#tpu.dimension_semantics<parallel>], iteration_bounds = array<i64: 1>, scalar_prefetch = 0 : i64, scratch_operands = 0 : i64, tpu.core_type = #tpu.core_type<tc>, window_params = [{transform_indices = @transform_0, window_bounds = array<i64: 18, 1>}, {transform_indices = @transform_1, window_bounds = array<i64: 18, 2>}, {pipeline_mode = #tpu.pipeline_mode<synchronous>, transform_indices = @transform_2, window_bounds = array<i64: 1, 128>}, {pipeline_mode = #tpu.pipeline_mode<synchronous>, transform_indices = @transform_3, window_bounds = array<i64: 2, 128>}, {pipeline_mode = #tpu.pipeline_mode<synchronous>, transform_indices = @transform_4, window_bounds = array<i64: 1, 128>}, {pipeline_mode = #tpu.pipeline_mode<synchronous>, transform_indices = @transform_5, window_bounds = array<i64: 128, 128>}, {pipeline_mode = #tpu.pipeline_mode<synchronous>, transform_indices = @transform_6, window_bounds = array<i64: 1, 128>}, {pipeline_mode = #tpu.pipeline_mode<synchronous>, transform_indices = @transform_7, window_bounds = array<i64: 128, 32>}, {pipeline_mode = #tpu.pipeline_mode<synchronous>, transform_indices = @transform_8, window_bounds = array<i64: 1, 32>}, {transform_indices = @transform_9, window_bounds = array<i64: 18, 32>}]} {
    %c0 = arith.constant 0 : index
    %c0_0 = arith.constant 0 : index
    %0 = vector.load %arg1[%c0, %c0_0] : memref<18x1xf32, #tpu.memory_space<vmem>>, vector<18x1xf32>
    %c0_1 = arith.constant 0 : index
    %c0_2 = arith.constant 0 : index
    %1 = vector.load %arg2[%c0_1, %c0_2] : memref<18x2xf32, #tpu.memory_space<vmem>>, vector<18x2xf32>
    %c0_3 = arith.constant 0 : index
    %c0_4 = arith.constant 0 : index
    %2 = vector.load %arg3[%c0_3, %c0_4] : memref<1x128xf32, #tpu.memory_space<vmem>>, vector<1x128xf32>
    %c0_5 = arith.constant 0 : index
    %c0_6 = arith.constant 0 : index
    %3 = vector.load %arg4[%c0_5, %c0_6] : memref<2x128xf32, #tpu.memory_space<vmem>>, vector<2x128xf32>
    %c0_7 = arith.constant 0 : index
    %c0_8 = arith.constant 0 : index
    %4 = vector.load %arg5[%c0_7, %c0_8] : memref<1x128xf32, #tpu.memory_space<vmem>>, vector<1x128xf32>
    %5 = vector.broadcast %0 : vector<18x1xf32> to vector<18x128xf32>
    %6 = vector.broadcast %2 : vector<1x128xf32> to vector<18x128xf32>
    %7 = arith.mulf %5, %6 : vector<18x128xf32>
    %8 = vector.broadcast %4 : vector<1x128xf32> to vector<18x128xf32>
    %9 = arith.addf %8, %7 : vector<18x128xf32>
    %10 = vector.extract_strided_slice %1 {offsets = [0, 0], sizes = [18, 1], strides = [1, 1]} : vector<18x2xf32> to vector<18x1xf32>
    %11 = vector.extract_strided_slice %3 {offsets = [0, 0], sizes = [1, 128], strides = [1, 1]} : vector<2x128xf32> to vector<1x128xf32>
    %12 = vector.broadcast %10 : vector<18x1xf32> to vector<18x128xf32>
    %13 = vector.broadcast %11 : vector<1x128xf32> to vector<18x128xf32>
    %14 = arith.mulf %12, %13 : vector<18x128xf32>
    %15 = arith.addf %9, %14 : vector<18x128xf32>
    %16 = vector.extract_strided_slice %1 {offsets = [0, 1], sizes = [18, 1], strides = [1, 1]} : vector<18x2xf32> to vector<18x1xf32>
    %17 = vector.extract_strided_slice %3 {offsets = [1, 0], sizes = [1, 128], strides = [1, 1]} : vector<2x128xf32> to vector<1x128xf32>
    %18 = vector.broadcast %16 : vector<18x1xf32> to vector<18x128xf32>
    %19 = vector.broadcast %17 : vector<1x128xf32> to vector<18x128xf32>
    %20 = arith.mulf %18, %19 : vector<18x128xf32>
    %21 = arith.addf %15, %20 : vector<18x128xf32>
    %cst = arith.constant 0.000000e+00 : f32
    %22 = vector.broadcast %cst : f32 to vector<18x128xf32>
    %23 = arith.maximumf %21, %22 : vector<18x128xf32>
    %24 = arith.truncf %23 : vector<18x128xf32> to vector<18x128xbf16>
    %c0_9 = arith.constant 0 : index
    %c0_10 = arith.constant 0 : index
    %25 = vector.load %arg6[%c0_9, %c0_10] : memref<128x128xbf16, #tpu.memory_space<vmem>>, vector<128x128xbf16>
    %cst_11 = arith.constant dense<0.000000e+00> : vector<18x128xf32>
    %26 = tpu.matmul %24, %25, %cst_11 {dimension_numbers = #tpu.dot_dimension_numbers<[1], [0], [0], [1], [0, 0, 1, 1], [], []>} : vector<18x128xbf16>, vector<128x128xbf16>, vector<18x128xf32> -> vector<18x128xf32>
    %c0_12 = arith.constant 0 : index
    %c0_13 = arith.constant 0 : index
    %27 = vector.load %arg7[%c0_12, %c0_13] : memref<1x128xf32, #tpu.memory_space<vmem>>, vector<1x128xf32>
    %28 = vector.broadcast %27 : vector<1x128xf32> to vector<18x128xf32>
    %29 = arith.addf %26, %28 : vector<18x128xf32>
    %cst_14 = arith.constant 0.000000e+00 : f32
    %30 = vector.broadcast %cst_14 : f32 to vector<18x128xf32>
    %31 = arith.maximumf %29, %30 : vector<18x128xf32>
    %32 = arith.truncf %31 : vector<18x128xf32> to vector<18x128xbf16>
    %c0_15 = arith.constant 0 : index
    %c0_16 = arith.constant 0 : index
    %33 = vector.load %arg8[%c0_15, %c0_16] : memref<128x32xbf16, #tpu.memory_space<vmem>>, vector<128x32xbf16>
    %cst_17 = arith.constant dense<0.000000e+00> : vector<18x32xf32>
    %34 = tpu.matmul %32, %33, %cst_17 {dimension_numbers = #tpu.dot_dimension_numbers<[1], [0], [0], [1], [0, 0, 1, 1], [], []>} : vector<18x128xbf16>, vector<128x32xbf16>, vector<18x32xf32> -> vector<18x32xf32>
    %c0_18 = arith.constant 0 : index
    %c0_19 = arith.constant 0 : index
    %35 = vector.load %arg9[%c0_18, %c0_19] : memref<1x32xf32, #tpu.memory_space<vmem>>, vector<1x32xf32>
    %36 = vector.broadcast %35 : vector<1x32xf32> to vector<18x32xf32>
    %37 = arith.addf %34, %36 : vector<18x32xf32>
    %c0_20 = arith.constant 0 : index
    %c0_21 = arith.constant 0 : index
    %38 = vector.load %arg10[%c0_20, %c0_21] : memref<18x32xf32, #tpu.memory_space<vmem>>, vector<18x32xf32>
    tpu.vector_store %arg10[%c0_20, %c0_21], %37 {strides = array<i32>} : memref<18x32xf32, #tpu.memory_space<vmem>>, vector<18x32xf32>,
    return
  }
  func.func @transform_0(%arg0: i32) -> (i32, i32) {
    %c0_i32 = arith.constant 0 : i32
    %c0_i32_0 = arith.constant 0 : i32
    return %arg0, %c0_i32 : i32, i32
  }
  func.func @transform_1(%arg0: i32) -> (i32, i32) {
    %c0_i32 = arith.constant 0 : i32
    %c0_i32_0 = arith.constant 0 : i32
    return %arg0, %c0_i32 : i32, i32
  }
  func.func @transform_2(%arg0: i32) -> (i32, i32) {
    %c0_i32 = arith.constant 0 : i32
    %c0_i32_0 = arith.constant 0 : i32
    %c0_i32_1 = arith.constant 0 : i32
    return %c0_i32, %c0_i32_0 : i32, i32
  }
  func.func @transform_3(%arg0: i32) -> (i32, i32) {
    %c0_i32 = arith.constant 0 : i32
    %c0_i32_0 = arith.constant 0 : i32
    %c0_i32_1 = arith.constant 0 : i32
    return %c0_i32, %c0_i32_0 : i32, i32
  }
  func.func @transform_4(%arg0: i32) -> (i32, i32) {
    %c0_i32 = arith.constant 0 : i32
    %c0_i32_0 = arith.constant 0 : i32
    %c0_i32_1 = arith.constant 0 : i32
    return %c0_i32, %c0_i32_0 : i32, i32
  }
  func.func @transform_5(%arg0: i32) -> (i32, i32) {
    %c0_i32 = arith.constant 0 : i32
    %c0_i32_0 = arith.constant 0 : i32
    %c0_i32_1 = arith.constant 0 : i32
    return %c0_i32, %c0_i32_0 : i32, i32
  }
  func.func @transform_6(%arg0: i32) -> (i32, i32) {
    %c0_i32 = arith.constant 0 : i32
    %c0_i32_0 = arith.constant 0 : i32
    %c0_i32_1 = arith.constant 0 : i32
    return %c0_i32, %c0_i32_0 : i32, i32
  }
  func.func @transform_7(%arg0: i32) -> (i32, i32) {
    %c0_i32 = arith.constant 0 : i32
    %c0_i32_0 = arith.constant 0 : i32
    %c0_i32_1 = arith.constant 0 : i32
    return %c0_i32, %c0_i32_0 : i32, i32
  }
  func.func @transform_8(%arg0: i32) -> (i32, i32) {
    %c0_i32 = arith.constant 0 : i32
    %c0_i32_0 = arith.constant 0 : i32
    %c0_i32_1 = arith.constant 0 : i32
    return %c0_i32, %c0_i32_0 : i32, i32
  }
  func.func @transform_9(%arg0: i32) -> (i32, i32) {
    %c0_i32 = arith.constant 0 : i32
    %c0_i32_0 = arith.constant 0 : i32
    return %arg0, %c0_i32 : i32, i32
  }
}

</mosaic_0001>

<llo_original>
// kernel: tpu_custom_call.1
$region0: #{tpu_custom_call.1}
  #allocation0 [shape = 'u32[]', space=smem, size = 0x4, offset = 0x4, fixed_abs, tag = 'smem constant byte address 0x4 - core index']
  #allocation1 [shape = 'u32[144,128]{1,0:T(1,128)}', space=vmem, size = 0x12000, scoped, tag = 'internal scratch']
  %s0 = inlined_call_operand.vmem [shape: f32[18,1], index: 0, kind: input, shape index: {}]
  %s1 = inlined_call_operand.vmem [shape: f32[18,2], index: 1, kind: input, shape index: {}]
  %s2 = inlined_call_operand.vmem [shape: f32[1,128], index: 2, kind: input, shape index: {}]
  %s3 = inlined_call_operand.vmem [shape: f32[2,128], index: 3, kind: input, shape index: {}]
  %s4 = inlined_call_operand.vmem [shape: f32[1,128], index: 4, kind: input, shape index: {}]
  %s5 = inlined_call_operand.vmem [shape: bf16[128,128], index: 5, kind: input, shape index: {}]
  %s6 = inlined_call_operand.vmem [shape: f32[1,128], index: 6, kind: input, shape index: {}]
  %s7 = inlined_call_operand.vmem [shape: bf16[128,32], index: 7, kind: input, shape index: {}]
  %s8 = inlined_call_operand.vmem [shape: f32[1,32], index: 8, kind: input, shape index: {}]
  %s9 = inlined_call_operand.hbm [shape: f32[18,32], index: 9, kind: output, shape index: {}]
  %s10 = sld [smem:[#allocation0]]
  $region46: #{tpu_custom_call.1} parent=0
    _
  %s12 = ssub.s32 1, %s10
  %s13 = scalar_select 0, %s12, %s10
  $region1: #{tpu_custom_call.1} parent=0
    #allocation2 [shape = 'u8[12288]{0}', space=vmem, size = 0x3000, scoped, tag = 'output window, operand 0, single buffered']
    #allocation3 [shape = 's32[1]{0}', space=sflag, size = 0x4, scoped, tag = 'scoped memory for tpu_custom_call.1']
    %14 = vsyncpa [#allocation3], 0
    // Predicated region
    $region2: #{tpu_custom_call.1} parent=1 // pred_check
      _
    $region3: #{tpu_custom_call.1} parent=1 // pred_check_branch
      %16 = sbr.rel (0) target = $region5
    $region4: #{tpu_custom_call.1} parent=1 // pred_region
      _
    $region5: #{tpu_custom_call.1} parent=1 // pred_fallthru
      _
    // Predicated region
    $region6: #{tpu_custom_call.1} parent=1 // pred_check
      _
    $region7: #{tpu_custom_call.1} parent=1 // pred_check_branch
      %18 = sbr.rel (0) target = $region9
    $region8: #{tpu_custom_call.1} parent=1 // pred_region
      _
    $region9: #{tpu_custom_call.1} parent=1 // pred_fallthru
      _
    // Predicated region
    $region10: #{tpu_custom_call.1} parent=1 // pred_check
      _
    $region11: #{tpu_custom_call.1} parent=1 // pred_check_branch
      %20 = sbr.rel (0) target = $region13
    $region12: #{tpu_custom_call.1} parent=1 // pred_region
      _
    $region13: #{tpu_custom_call.1} parent=1 // pred_fallthru
      _
    // Predicated region
    $region14: #{tpu_custom_call.1} parent=1 // pred_check
      _
    $region15: #{tpu_custom_call.1} parent=1 // pred_check_branch
      %22 = sbr.rel (0) target = $region17
    $region16: #{tpu_custom_call.1} parent=1 // pred_region
      _
    $region17: #{tpu_custom_call.1} parent=1 // pred_fallthru
      _
    // Predicated region
    $region18: #{tpu_custom_call.1} parent=1 // pred_check
      _
    $region19: #{tpu_custom_call.1} parent=1 // pred_check_branch
      %24 = sbr.rel (0) target = $region21
    $region20: #{tpu_custom_call.1} parent=1 // pred_region
      _
    $region21: #{tpu_custom_call.1} parent=1 // pred_fallthru
      _
    // Predicated region
    $region22: #{tpu_custom_call.1} parent=1 // pred_check
      _
    $region23: #{tpu_custom_call.1} parent=1 // pred_check_branch
      %26 = sbr.rel (0) target = $region25
    $region24: #{tpu_custom_call.1} parent=1 // pred_region
      _
    $region25: #{tpu_custom_call.1} parent=1 // pred_fallthru
      _
    // Predicated region
    $region26: #{tpu_custom_call.1} parent=1 // pred_check
      _
    $region27: #{tpu_custom_call.1} parent=1 // pred_check_branch
      %28 = sbr.rel (0) target = $region29
    $region28: #{tpu_custom_call.1} parent=1 // pred_region
      _
    $region29: #{tpu_custom_call.1} parent=1 // pred_fallthru
      _
    // Predicated region
    $region30: #{tpu_custom_call.1} parent=1 // pred_check
      _
    $region31: #{tpu_custom_call.1} parent=1 // pred_check_branch
      %30 = sbr.rel (0) target = $region33
    $region32: #{tpu_custom_call.1} parent=1 // pred_region
      _
    $region33: #{tpu_custom_call.1} parent=1 // pred_fallthru
      _
    // Predicated region
    $region34: #{tpu_custom_call.1} parent=1 // pred_check
      _
    $region35: #{tpu_custom_call.1} parent=1 // pred_check_branch
      %32 = sbr.rel (0) target = $region37
    $region36: #{tpu_custom_call.1} parent=1 // pred_region
      _
    $region37: #{tpu_custom_call.1} parent=1 // pred_fallthru
      _
    %v34 = vld [vmem:[%s0] sm:$0xff]
    %v35 = vld [vmem:[%s0 + $0x8] sm:$0xff]
    %v36 = vld [vmem:[%s0 + $0x10] sm:$0x3]
    %v37 = vld [vmem:[%s1] sm:$0xff]
    %v38 = vld [vmem:[%s1 + $0x8] sm:$0xff]
    %v39 = vld [vmem:[%s1 + $0x10] sm:$0x3]
    %v40 = vld [vmem:[%s2] sm:$0x1]
    %v41 = vld [vmem:[%s3] sm:$0x3]
    %v42 = vld [vmem:[%s4] sm:$0x1]
    %44 = vset.pattern.permute.xlu0 0
    %45 = vperm.xlu0 %44, %v34
    %v46 = vpop.permute.xlu0 %45
    %49 = vset.pattern.permute.xlu0 0
    %50 = vperm.xlu0 %49, %v35
    %v51 = vpop.permute.xlu0 %50
    %54 = vset.pattern.permute.xlu0 0
    %55 = vperm.xlu0 %54, %v36
    %v56 = vpop.permute.xlu0 %55
    %v59 = vlaneseq
    %v60 = vshrl.u32 %v59, 7
    %v61 = vsub.s32 0, %v60
    %v62 = vrot.slane %v40, %v61
    %v64 = vmul.f32 %v46, %v62
    %v65 = vmul.f32 %v51, %v62
    %v66 = vmul.f32 %v56, %v62
    %v68 = vlaneseq
    %v69 = vshrl.u32 %v68, 7
    %v70 = vsub.s32 0, %v69
    %v71 = vrot.slane %v42, %v70
    %v73 = vadd.f32 %v71, %v64
    %v74 = vadd.f32 %v71, %v65
    %v75 = vadd.f32 %v71, %v66
    %77 = vset.pattern.permute.xlu0 0
    %78 = vperm.xlu0 %77, %v37
    %v79 = vpop.permute.xlu0 %78
    %82 = vset.pattern.permute.xlu0 0
    %83 = vperm.xlu0 %82, %v38
    %v84 = vpop.permute.xlu0 %83
    %87 = vset.pattern.permute.xlu0 0
    %88 = vperm.xlu0 %87, %v39
    %v89 = vpop.permute.xlu0 %88
    %v91 = vlaneseq
    %v92 = vshrl.u32 %v91, 7
    %v93 = vsub.s32 0, %v92
    %v94 = vrot.slane %v41, %v93
    %v95 = vmul.f32 %v79, %v94
    %v96 = vmul.f32 %v84, %v94
    %v97 = vmul.f32 %v89, %v94
    %v98 = vadd.f32 %v73, %v95
    %v99 = vadd.f32 %v74, %v96
    %v100 = vadd.f32 %v75, %v97
    %101 = vset.pattern.permute.xlu0 1
    %102 = vperm.xlu0 %101, %v37
    %v103 = vpop.permute.xlu0 %102
    %105 = vset.pattern.permute.xlu0 1
    %106 = vperm.xlu0 %105, %v38
    %v107 = vpop.permute.xlu0 %106
    %109 = vset.pattern.permute.xlu0 1
    %110 = vperm.xlu0 %109, %v39
    %v111 = vpop.permute.xlu0 %110
    %v113 = vlaneseq
    %v114 = vshrl.u32 %v113, 7
    %v115 = vsub.s32 1, %v114
    %v116 = vrot.slane %v41, %v115
    %v117 = vmul.f32 %v103, %v116
    %v118 = vmul.f32 %v107, %v116
    %v119 = vmul.f32 %v111, %v116
    %v120 = vadd.f32 %v98, %v117
    %v121 = vadd.f32 %v99, %v118
    %v122 = vadd.f32 %v100, %v119
    %v123 = vmax.f32 %v120, 0.0
    %v124 = vmax.f32 %v121, 0.0
    %v125 = vmax.f32 %v122, 0.0
    %v126 = vpack.c.bf16 %v124, %v123
    %v127 = vpack.c.bf16 %v125, %v125
    %v128 = vld [vmem:[%s5] sm:$0xf]
    %v129 = vld [vmem:[%s5 + $0x4] sm:$0xf]
    %v130 = vld [vmem:[%s5 + $0x8] sm:$0xf]
    %v131 = vld [vmem:[%s5 + $0xc] sm:$0xf]
    %v132 = vld [vmem:[%s5 + $0x10] sm:$0xf]
    %v133 = vld [vmem:[%s5 + $0x14] sm:$0xf]
    %v134 = vld [vmem:[%s5 + $0x18] sm:$0xf]
    %v135 = vld [vmem:[%s5 + $0x1c] sm:$0xf]
    %v136 = vld [vmem:[%s5 + $0x20] sm:$0xf]
    %v137 = vld [vmem:[%s5 + $0x24] sm:$0xf]
    %v138 = vld [vmem:[%s5 + $0x28] sm:$0xf]
    %v139 = vld [vmem:[%s5 + $0x2c] sm:$0xf]
    %v140 = vld [vmem:[%s5 + $0x30] sm:$0xf]
    %v141 = vld [vmem:[%s5 + $0x34] sm:$0xf]
    %v142 = vld [vmem:[%s5 + $0x38] sm:$0xf]
    %v143 = vld [vmem:[%s5 + $0x3c] sm:$0xf]
    %v144 = vld [vmem:[%s6] sm:$0x1]
    %v146 = vlaneseq
    %v147 = vshrl.u32 %v146, 7
    %v148 = vsub.s32 0, %v147
    %v149 = vrot.slane %v144, %v148
    %v167 = vunpack.c.l.b16 %v128
    %v168 = vunpack.c.l.b16 %v129
    %v169 = vunpack.c.l.b16 %v130
    %v170 = vunpack.c.l.b16 %v131
    %v171 = vunpack.c.l.b16 %v132
    %v172 = vunpack.c.l.b16 %v133
    %v173 = vunpack.c.l.b16 %v134
    %v174 = vunpack.c.l.b16 %v135
    %v175 = vunpack.c.l.b16 %v136
    %v176 = vunpack.c.l.b16 %v137
    %v177 = vunpack.c.l.b16 %v138
    %v178 = vunpack.c.l.b16 %v139
    %v179 = vunpack.c.l.b16 %v140
    %v180 = vunpack.c.l.b16 %v141
    %v181 = vunpack.c.l.b16 %v142
    %v182 = vunpack.c.l.b16 %v143
    %v183 = vpack.c.b16 %v168, %v167
    %v184 = vpack.c.b16 %v170, %v169
    %v185 = vpack.c.b16 %v172, %v171
    %v186 = vpack.c.b16 %v174, %v173
    %v187 = vpack.c.b16 %v176, %v175
    %v188 = vpack.c.b16 %v178, %v177
    %v189 = vpack.c.b16 %v180, %v179
    %v190 = vpack.c.b16 %v182, %v181
    %199 = vmatprep.subr.bf16.mxu0 0
    %200 = vmatpush1.bf16.msra.mxu0 %v190
    %201 = vmatprep.subr.bf16.mxu0 0
    %202 = vmatpush1.bf16.msra.mxu0 %v189
    %203 = vmatprep.subr.bf16.mxu0 0
    %204 = vmatpush1.bf16.msra.mxu0 %v188
    %205 = vmatprep.subr.bf16.mxu0 0
    %206 = vmatpush1.bf16.msra.mxu0 %v187
    %207 = vmatprep.subr.bf16.mxu0 0
    %208 = vmatpush1.bf16.msra.mxu0 %v186
    %209 = vmatprep.subr.bf16.mxu0 0
    %210 = vmatpush1.bf16.msra.mxu0 %v185
    %211 = vmatprep.subr.bf16.mxu0 0
    %212 = vmatpush1.bf16.msra.mxu0 %v184
    %213 = vmatprep.subr.bf16.mxu0 0
    %214 = vmatpush1.bf16.msra.mxu0 %v183
    %215 = vmatprep.subr.bf16.mxu0 0
    %216 = vmatpush2.bf16.msra.mxu0 0
    %217 = vmatprep.subr.bf16.mxu0 0
    %218 = vmatpush2.bf16.msra.mxu0 0
    %219 = vmatprep.subr.bf16.mxu0 0
    %220 = vmatpush2.bf16.msra.mxu0 0
    %221 = vmatprep.subr.bf16.mxu0 0
    %222 = vmatpush2.bf16.msra.mxu0 0
    %223 = vmatprep.subr.bf16.mxu0 0
    %224 = vmatpush2.bf16.msra.mxu0 0
    %225 = vmatprep.subr.bf16.mxu0 0
    %226 = vmatpush2.bf16.msra.mxu0 0
    %227 = vmatprep.subr.bf16.mxu0 0
    %228 = vmatpush2.bf16.msra.mxu0 0
    %229 = vmatprep.subr.bf16.mxu0 0
    %230 = vmatpush2.bf16.msra.mxu0 0
    %231 = vmatprep.mubr.bf16.mxu0 0
    %232 = vmatmul.mubr.bf16.gmra.mxu0 %v126
    %v233 = vpop.f32.mrf.mxu0
    %v234 = vadd.f32 %v149, %v233
    %v235 = vpop.f32.mrf.mxu0
    %v236 = vpop.f32.mrf.mxu0
    %v237 = vadd.f32 %v149, %v236
    %v238 = vpop.f32.mrf.mxu0
    %239 = vmatprep.mubr.bf16.mxu0 0
    %240 = vmatmul.mubr.bf16.gmra.mxu0 %v127
    %v241 = vpop.f32.mrf.mxu0
    %v242 = vadd.f32 %v149, %v241
    %v243 = vpop.f32.mrf.mxu0
    %v244 = vpop.f32.mrf.mxu0
    %v245 = vpop.f32.mrf.mxu0
    %246 = vdwg.mxu0
    %v247 = vmax.f32 %v234, 0.0
    %v248 = vmax.f32 %v237, 0.0
    %v249 = vmax.f32 %v242, 0.0
    %v250 = vpack.c.bf16 %v248, %v247
    %v251 = vpack.c.bf16 %v249, %v249
    %v252 = vld [vmem:[%s7] sm:$0xf]
    %v253 = vld [vmem:[%s7 + $0x4] sm:$0xf]
    %v254 = vld [vmem:[%s7 + $0x8] sm:$0xf]
    %v255 = vld [vmem:[%s7 + $0xc] sm:$0xf]
    %v256 = vld [vmem:[%s7 + $0x10] sm:$0xf]
    %v257 = vld [vmem:[%s7 + $0x14] sm:$0xf]
    %v258 = vld [vmem:[%s7 + $0x18] sm:$0xf]
    %v259 = vld [vmem:[%s7 + $0x1c] sm:$0xf]
    %v260 = vld [vmem:[%s7 + $0x20] sm:$0xf]
    %v261 = vld [vmem:[%s7 + $0x24] sm:$0xf]
    %v262 = vld [vmem:[%s7 + $0x28] sm:$0xf]
    %v263 = vld [vmem:[%s7 + $0x2c] sm:$0xf]
    %v264 = vld [vmem:[%s7 + $0x30] sm:$0xf]
    %v265 = vld [vmem:[%s7 + $0x34] sm:$0xf]
    %v266 = vld [vmem:[%s7 + $0x38] sm:$0xf]
    %v267 = vld [vmem:[%s7 + $0x3c] sm:$0xf]
    %v268 = vld [vmem:[%s8] sm:$0x1]
    %v270 = vlaneseq
    %v271 = vshrl.u32 %v270, 7
    %v272 = vsub.s32 0, %v271
    %v273 = vrot.slane %v268, %v272
    %v291 = vunpack.c.l.b16 %v252
    %v292 = vunpack.c.l.b16 %v253
    %v293 = vunpack.c.l.b16 %v254
    %v294 = vunpack.c.l.b16 %v255
    %v295 = vunpack.c.l.b16 %v256
    %v296 = vunpack.c.l.b16 %v257
    %v297 = vunpack.c.l.b16 %v258
    %v298 = vunpack.c.l.b16 %v259
    %v299 = vunpack.c.l.b16 %v260
    %v300 = vunpack.c.l.b16 %v261
    %v301 = vunpack.c.l.b16 %v262
    %v302 = vunpack.c.l.b16 %v263
    %v303 = vunpack.c.l.b16 %v264
    %v304 = vunpack.c.l.b16 %v265
    %v305 = vunpack.c.l.b16 %v266
    %v306 = vunpack.c.l.b16 %v267
    %v307 = vpack.c.b16 %v292, %v291
    %v308 = vpack.c.b16 %v294, %v293
    %v309 = vpack.c.b16 %v296, %v295
    %v310 = vpack.c.b16 %v298, %v297
    %v311 = vpack.c.b16 %v300, %v299
    %v312 = vpack.c.b16 %v302, %v301
    %v313 = vpack.c.b16 %v304, %v303
    %v314 = vpack.c.b16 %v306, %v305
    %323 = vmatprep.subr.bf16.mxu0 0
    %324 = vmatpush1.bf16.msra.mxu0 %v314
    %325 = vmatprep.subr.bf16.mxu0 0
    %326 = vmatpush1.bf16.msra.mxu0 %v313
    %327 = vmatprep.subr.bf16.mxu0 0
    %328 = vmatpush1.bf16.msra.mxu0 %v312
    %329 = vmatprep.subr.bf16.mxu0 0
    %330 = vmatpush1.bf16.msra.mxu0 %v311
    %331 = vmatprep.subr.bf16.mxu0 0
    %332 = vmatpush1.bf16.msra.mxu0 %v310
    %333 = vmatprep.subr.bf16.mxu0 0
    %334 = vmatpush1.bf16.msra.mxu0 %v309
    %335 = vmatprep.subr.bf16.mxu0 0
    %336 = vmatpush1.bf16.msra.mxu0 %v308
    %337 = vmatprep.subr.bf16.mxu0 0
    %338 = vmatpush1.bf16.msra.mxu0 %v307
    %339 = vmatprep.subr.bf16.mxu0 0
    %340 = vmatpush2.bf16.msra.mxu0 0
    %341 = vmatprep.subr.bf16.mxu0 0
    %342 = vmatpush2.bf16.msra.mxu0 0
    %343 = vmatprep.subr.bf16.mxu0 0
    %344 = vmatpush2.bf16.msra.mxu0 0
    %345 = vmatprep.subr.bf16.mxu0 0
    %346 = vmatpush2.bf16.msra.mxu0 0
    %347 = vmatprep.subr.bf16.mxu0 0
    %348 = vmatpush2.bf16.msra.mxu0 0
    %349 = vmatprep.subr.bf16.mxu0 0
    %350 = vmatpush2.bf16.msra.mxu0 0
    %351 = vmatprep.subr.bf16.mxu0 0
    %352 = vmatpush2.bf16.msra.mxu0 0
    %353 = vmatprep.subr.bf16.mxu0 0
    %354 = vmatpush2.bf16.msra.mxu0 0
    %355 = vmatprep.mubr.bf16.mxu0 0
    %356 = vmatmul.mubr.bf16.gmra.mxu0 %v250
    %v357 = vpop.f32.mrf.mxu0
    %v358 = vadd.f32 %v273, %v357
    %v359 = vpop.f32.mrf.mxu0
    %v360 = vpop.f32.mrf.mxu0
    %v361 = vadd.f32 %v273, %v360
    %v362 = vpop.f32.mrf.mxu0
    %363 = vmatprep.mubr.bf16.mxu0 0
    %364 = vmatmul.mubr.bf16.gmra.mxu0 %v251
    %v365 = vpop.f32.mrf.mxu0
    %v366 = vadd.f32 %v273, %v365
    %v367 = vpop.f32.mrf.mxu0
    %v368 = vpop.f32.mrf.mxu0
    %v369 = vpop.f32.mrf.mxu0
    %370 = vdwg.mxu0
    %vm371 = vcmask 261120
    %372 = vst.msk [vmem:[#allocation2] sm:$0xff] %vm371, %v358
    %373 = vst.msk [vmem:[#allocation2 + $0x8] sm:$0xff] %vm371, %v361
    %vm374 = vcmask 254976
    %375 = vst.msk [vmem:[#allocation2 + $0x10] sm:$0x3] %vm374, %v366
    // Predicated region
    $region38: #{tpu_custom_call.1} parent=1 // pred_check
      _
    $region39: #{tpu_custom_call.1} parent=1 // pred_check_branch
      %377 = sbr.rel (0) target = $region41
    $region40: #{tpu_custom_call.1} parent=1 // pred_region
      %s379 = ssub.s32 384, 384
      %380 = vsyncadd [#allocation3], %s379
      %s381 = sshll.u32 [#allocation2], 4
      %s382 = int_to_ptr.vmem [resolvable:$true] %s381
      %387 = dma.vmem_to_hbm [thread:$0]  %s382, 384, %s9, [#allocation3], 128, 128, 8
    $region41: #{tpu_custom_call.1} parent=1 // pred_fallthru
      _
    // Predicated region
    $region42: #{tpu_custom_call.1} parent=1 // pred_check
      _
    $region43: #{tpu_custom_call.1} parent=1 // pred_check_branch
      %389 = sbr.rel (0) target = $region45
    $region44: #{tpu_custom_call.1} parent=1 // pred_region
      %390 = dma.done [#allocation3], 384
    $region45: #{tpu_custom_call.1} parent=1 // pred_fallthru
      _
    %391 = vsyncpa [#allocation3], 1

</llo_original>
